<compile_context>
chip_gen: v7x
topology: tpu7x:2x2x1
jax: 0.10.0
libtpu: 0.0.40
codegen_flags: <defaults>
</compile_context>

<pallas_src>
import functools
import math

import jax
import jax.numpy as jnp
from jax import lax
from jax.experimental import pallas as pl
from jax.experimental.pallas import tpu as pltpu


def _build_pe(max_len: int, embedding_dim: int) -> jnp.ndarray:
    """Sinusoidal PE buffer, same math as the PyTorch __init__ (odd-dim safe)."""
    position = jnp.arange(max_len, dtype=jnp.float32)[:, None]            # (max_len, 1)
    div_term = jnp.exp(
        jnp.arange(0, embedding_dim, 2, dtype=jnp.float32)
        * (-math.log(10000.0) / embedding_dim)
    )                                                                      # (ceil(D/2),)
    pe = jnp.zeros((max_len, embedding_dim), dtype=jnp.float32)
    pe = pe.at[:, 0::2].set(jnp.sin(position * div_term))
    pe = pe.at[:, 1::2].set(jnp.cos(position * div_term)[:, : embedding_dim // 2])
    return pe


def _pe_kernel(seed_ref, x_ref, pe_ref, o_ref, *, p, training, block_rows, row_width):
    # x_ref: (TB, W')   pe_ref: (1, W')  -> plain broadcast add on the VPU.
    y = x_ref[...] + pe_ref[...]

    if training and p > 0.0:
        # Counter-based dropout: murmur3-hash(global flat element index, seed)
        # -> 24 random bits, keep iff bits >= p * 2^24.  Pure int32 VPU ops,
        # hidden entirely under the HBM streaming bottleneck.
        tb, w = y.shape
        row = lax.broadcasted_iota(jnp.uint32, (tb, w), 0)
        col = lax.broadcasted_iota(jnp.uint32, (tb, w), 1)
        base = (pl.program_id(0) * block_rows).astype(jnp.uint32)
        idx = (base + row) * jnp.uint32(row_width) + col
        h = idx ^ (seed_ref[0].astype(jnp.uint32) * jnp.uint32(0x9E3779B9))
        h = h ^ (h >> 16)
        h = h * jnp.uint32(0x85EBCA6B)
        h = h ^ (h >> 13)
        h = h * jnp.uint32(0xC2B2AE35)
        h = h ^ (h >> 16)
        threshold = jnp.uint32(min(int(p * (1 << 24)), (1 << 24) - 1))
        keep = (h >> 8) >= threshold                       # keep prob ~= 1 - p
        scale = jnp.asarray(1.0 / (1.0 - p), dtype=y.dtype)
        y = jnp.where(keep, y * scale, jnp.zeros((), dtype=y.dtype))

    o_ref[...] = y.astype(o_ref.dtype)


def _choose_row_pack(batch: int, row_elems: int, max_pack_elems: int = 16 * 1024) -> int:
    """Pick G | batch: pack G logical rows into one lane-row of width G*row_elems.

    Prefer the smallest G whose packed width is a multiple of 128 lanes
    (fully dense vector stores); otherwise the largest divisor under the cap
    (larger rows -> smaller masked-lane fraction).  The cap keeps the tiled PE
    row tiny so it costs ~nothing to build and stays resident in VMEM.
    """
    max_g = max(1, max_pack_elems // max(1, row_elems))
    divisors = [g for g in range(1, min(batch, max_g) + 1) if batch % g == 0]
    if not divisors:
        return 1
    aligned = [g for g in divisors if (g * row_elems) % 128 == 0]
    return aligned[0] if aligned else divisors[-1]


def _choose_block_rows(num_rows: int, row_bytes: int, target_bytes: int = 1 << 20) -> int:
    """Rows per grid step: ~1 MiB per input block, multiple of 8 sublanes.

    ~1 MiB/buffer keeps double-buffered input + output well under the scoped
    VMEM limit on every generation (incl. v7x's 64 MiB physical / 32 MiB scoped).
    """
    tb = max(1, target_bytes // max(1, row_bytes))
    if num_rows <= 8:
        return num_rows                        # full extent satisfies the block rule
    tb = min(tb, num_rows)
    return max(8, (tb // 8) * 8)


def fixed_positional_encoding(x, pe, *, p: float = 0.1, training: bool = False, seed: int = 0):
    """Pallas forward of FixedPositionalEncoding: dropout(x + pe[:S])."""
    orig_shape = x.shape
    if x.ndim == 4:
        b4, ns, S, D = x.shape
        x = x.reshape(b4 * ns, S, D)
    elif x.ndim != 3:
        raise ValueError("expected [B, S, D] or [B, samples, S, D]")
    B, S, D = x.shape
    if S > pe.shape[0]:
        raise ValueError("seq_len exceeds max_len of the PE table")

    W = S * D
    G = _choose_row_pack(B, W)                      # rows packed per lane-row
    Wp = G * W                                      # lane-axis width inside the kernel
    R = B // G
    x2 = x.reshape(R, Wp)                           # contiguous -> free reshape
    pe_row = jnp.tile(pe[:S].astype(x.dtype).reshape(1, W), (1, G))   # (1, Wp), tiny

    tb = _choose_block_rows(R, Wp * x.dtype.itemsize)
    grid = (pl.cdiv(R, tb),)
    seed_arr = jnp.asarray([seed], dtype=jnp.int32)

    kernel = functools.partial(
        _pe_kernel, p=float(p), training=bool(training), block_rows=tb, row_width=Wp
    )
    out = pl.pallas_call(
        kernel,
        out_shape=jax.ShapeDtypeStruct((R, Wp), x.dtype),
        grid_spec=pltpu.PrefetchScalarGridSpec(
            num_scalar_prefetch=1,                  # dropout seed lives in SMEM
            grid=grid,
            in_specs=[
                pl.BlockSpec((tb, Wp), lambda i, seed: (i, 0)),
                pl.BlockSpec((1, Wp), lambda i, seed: (0, 0)),   # same block every step -> one DMA
            ],
            out_specs=pl.BlockSpec((tb, Wp), lambda i, seed: (i, 0)),
        ),
        compiler_params=pltpu.CompilerParams(
            dimension_semantics=("parallel",),      # shards row blocks across TCs (v7x)
        ),
    )(seed_arr, x2, pe_row)
    return out.reshape(orig_shape)


if __name__ == "__main__":
    key = jax.random.PRNGKey(0)
    max_len, embedding_dim, dropout_p = 50, 12, 0.1   # module defaults
    B, S, D = 2, 8, embedding_dim
    pe = _build_pe(max_len, embedding_dim)

    # Eval-mode forward (dropout = identity) -> exact reference check.
    x = jax.random.normal(key, (B, S, D), dtype=jnp.float32)
    y = fixed_positional_encoding(x, pe, p=dropout_p, training=False)
    jax.block_until_ready(y)
    ref = x + pe[None, :S, :]
    assert y.shape == x.shape and y.dtype == x.dtype
    assert jnp.allclose(y, ref, atol=1e-6), "mismatch vs reference"

    # 4-D input path [B, samples, S, D].
    x4 = jax.random.normal(jax.random.PRNGKey(1), (2, 3, S, D), dtype=jnp.float32)
    y4 = fixed_positional_encoding(x4, pe, p=dropout_p, training=False)
    jax.block_until_ready(y4)
    assert jnp.allclose(y4, x4 + pe[None, None, :S, :], atol=1e-6)

    # Larger batch: exercises lane-packing (G=4 -> 384-wide rows), a multi-step
    # grid and a ragged final block.
    xb = jax.random.normal(jax.random.PRNGKey(2), (200, S, D), dtype=jnp.float32)
    yb = fixed_positional_encoding(xb, pe, p=dropout_p, training=False)
    jax.block_until_ready(yb)
    ref_b = xb + pe[None, :S, :]
    assert jnp.allclose(yb, ref_b, atol=1e-6)

    # Training (dropout) path: every element must be 0 or ref/(1-p), and the
    # drop fraction must be close to p.
    y_train = fixed_positional_encoding(xb, pe, p=dropout_p, training=True, seed=42)
    jax.block_until_ready(y_train)
    scaled = ref_b / (1.0 - dropout_p)
    is_zero = jnp.isclose(y_train, 0.0, atol=1e-6)
    ok = is_zero | jnp.isclose(y_train, scaled, rtol=1e-5, atol=1e-5)
    assert bool(jnp.all(ok)), "dropout output not in {0, ref/(1-p)}"
    drop_frac = float(jnp.mean(is_zero))
    assert abs(drop_frac - dropout_p) < 0.05, f"drop fraction {drop_frac} far from {dropout_p}"

    print("KERNEL_OK")
</pallas_src>

<mosaic_0001>
module attributes {stable_mosaic.version = 11 : i64} {
  func.func @_pe_kernel(%arg0: i32, %arg1: memref<1xi32, #tpu.memory_space<smem>>, %arg2: memref<1x192xf32, #tpu.memory_space<vmem>>, %arg3: memref<1x192xf32, #tpu.memory_space<vmem>>, %arg4: memref<1x192xf32, #tpu.memory_space<vmem>>) attributes {dimension_semantics = [#tpu.dimension_semantics<parallel>], iteration_bounds = array<i64: 1>, scalar_prefetch = 1 : i64, scratch_operands = 0 : i64, tpu.core_type = #tpu.core_type<tc>, window_params = [{transform_indices = @transform_0, window_bounds = array<i64: 1, 192>}, {pipeline_mode = #tpu.pipeline_mode<synchronous>, transform_indices = @transform_1, window_bounds = array<i64: 1, 192>}, {transform_indices = @transform_2, window_bounds = array<i64: 1, 192>}]} {
    %c0 = arith.constant 0 : index
    %c0_0 = arith.constant 0 : index
    %0 = vector.load %arg2[%c0, %c0_0] : memref<1x192xf32, #tpu.memory_space<vmem>>, vector<1x192xf32>
    %c0_1 = arith.constant 0 : index
    %c0_2 = arith.constant 0 : index
    %1 = vector.load %arg3[%c0_1, %c0_2] : memref<1x192xf32, #tpu.memory_space<vmem>>, vector<1x192xf32>
    %2 = arith.addf %0, %1 : vector<1x192xf32>
    %c0_3 = arith.constant 0 : index
    %c0_4 = arith.constant 0 : index
    %3 = vector.load %arg4[%c0_3, %c0_4] : memref<1x192xf32, #tpu.memory_space<vmem>>, vector<1x192xf32>
    tpu.vector_store %arg4[%c0_3, %c0_4], %2 {strides = array<i32>} : memref<1x192xf32, #tpu.memory_space<vmem>>, vector<1x192xf32>,
    return
  }
  func.func @transform_0(%arg0: i32, %arg1: memref<1xi32, #tpu.memory_space<smem>>) -> (i32, i32) {
    %c0_i32 = arith.constant 0 : i32
    %c0_i32_0 = arith.constant 0 : i32
    return %arg0, %c0_i32 : i32, i32
  }
  func.func @transform_1(%arg0: i32, %arg1: memref<1xi32, #tpu.memory_space<smem>>) -> (i32, i32) {
    %c0_i32 = arith.constant 0 : i32
    %c0_i32_0 = arith.constant 0 : i32
    %c0_i32_1 = arith.constant 0 : i32
    return %c0_i32, %c0_i32_0 : i32, i32
  }
  func.func @transform_2(%arg0: i32, %arg1: memref<1xi32, #tpu.memory_space<smem>>) -> (i32, i32) {
    %c0_i32 = arith.constant 0 : i32
    %c0_i32_0 = arith.constant 0 : i32
    return %arg0, %c0_i32 : i32, i32
  }
}

</mosaic_0001>

<llo_original>
// kernel: tpu_custom_call.1
$region0: #{tpu_custom_call.1}
  #allocation0 [shape = 'u32[]', space=smem, size = 0x4, offset = 0x4, fixed_abs, tag = 'smem constant byte address 0x4 - core index']
  #allocation1 [shape = 'u32[144,128]{1,0:T(1,128)}', space=vmem, size = 0x12000, scoped, tag = 'internal scratch']
  #allocation2 [shape = 's32[1]{0}', space=sflag, size = 0x4, scoped, tag = 'scoped memory for tpu_custom_call.1']
  #allocation3 [shape = 's32[1]{0:T(128)S(6)}', space=smem, size = 0x200, scoped, tag = 'prefetched SMEM operand 0']
  %s0 = inlined_call_operand.<no memory space> [shape: s32[1], index: 0, kind: input, shape index: {}]
  %s1 = inlined_call_operand.vmem [shape: f32[1,192], index: 1, kind: input, shape index: {}]
  %s2 = inlined_call_operand.vmem [shape: f32[1,192], index: 2, kind: input, shape index: {}]
  %s3 = inlined_call_operand.hbm [shape: f32[1,192], index: 3, kind: output, shape index: {}]
  %s4 = sld [smem:[#allocation0]]
  $region18: #{tpu_custom_call.1} parent=0
    _
  %s6 = ssub.s32 1, %s4
  %s7 = scalar_select 0, %s6, %s4
  %8 = sst [smem:[#allocation3]] %s0
  $region1: #{tpu_custom_call.1} parent=0
    #allocation4 [shape = 'u8[1024]{0}', space=vmem, size = 0x400, scoped, tag = 'output window, operand 0, single buffered']
    #allocation5 [shape = 's32[1]{0}', space=sflag, size = 0x4, scoped, tag = 'scoped memory for tpu_custom_call.1']
    %9 = vsyncpa [#allocation5], 0
    // Predicated region
    $region2: #{tpu_custom_call.1} parent=1 // pred_check
      _
    $region3: #{tpu_custom_call.1} parent=1 // pred_check_branch
      %11 = sbr.rel (0) target = $region5
    $region4: #{tpu_custom_call.1} parent=1 // pred_region
      _
    $region5: #{tpu_custom_call.1} parent=1 // pred_fallthru
      _
    // Predicated region
    $region6: #{tpu_custom_call.1} parent=1 // pred_check
      _
    $region7: #{tpu_custom_call.1} parent=1 // pred_check_branch
      %13 = sbr.rel (0) target = $region9
    $region8: #{tpu_custom_call.1} parent=1 // pred_region
      _
    $region9: #{tpu_custom_call.1} parent=1 // pred_fallthru
      _
    %v14 = vld [vmem:[%s1] sm:$0x3]
    %v15 = vld [vmem:[%s2] sm:$0x3]
    %v16 = vadd.f32 %v14, %v15
    %v17 = vlaneseq
    %vm18 = vcmp.ge.s32.totalorder %v17, 0
    %vm19 = vcmp.lt.s32.totalorder %v17, 192
    %vm20 = vmand %vm18, %vm19
    %21 = vst.msk [vmem:[#allocation4] sm:$0x3] %vm20, %v16
    // Predicated region
    $region10: #{tpu_custom_call.1} parent=1 // pred_check
      _
    $region11: #{tpu_custom_call.1} parent=1 // pred_check_branch
      %23 = sbr.rel (0) target = $region13
    $region12: #{tpu_custom_call.1} parent=1 // pred_region
      %s25 = ssub.s32 32, 32
      %26 = vsyncadd [#allocation5], %s25
      %s28 = sshll.u32 [#allocation4], 4
      %s29 = int_to_ptr.vmem [resolvable:$true] %s28
      %31 = dma.vmem_to_hbm [thread:$0]  %s29, 32, %s3, [#allocation5]
    $region13: #{tpu_custom_call.1} parent=1 // pred_fallthru
      _
    // Predicated region
    $region14: #{tpu_custom_call.1} parent=1 // pred_check
      _
    $region15: #{tpu_custom_call.1} parent=1 // pred_check_branch
      %33 = sbr.rel (0) target = $region17
    $region16: #{tpu_custom_call.1} parent=1 // pred_region
      %34 = dma.done [#allocation5], 32
    $region17: #{tpu_custom_call.1} parent=1 // pred_fallthru
      _
    %35 = vsyncpa [#allocation5], 1

</llo_original>
